<compile_context>
chip_gen: v7x
topology: tpu7x:2x2x1
jax: 0.10.0
libtpu: 0.0.40
codegen_flags: <defaults>
</compile_context>

<pallas_src>
import functools

import jax
import jax.numpy as jnp
from jax.experimental import pallas as pl
from jax.experimental.pallas import tpu as pltpu


def critic_kernel(xs_ref, xa_ref, w1s_ref, w1a_ref, b1_ref, w2_ref, b2_ref,
                  w3_ref, b3_ref, o_ref, *, unroll_action):
    # xs: (tb, Ds)  xa: (tb, Da)
    # w1s: (Ds, H)  w1a: (Da, H)  b1: (1, H)
    # w2 : (H, H)   b2 : (1, H)
    # w3 : (1, H)   b3 : (1, 1) scalar in SMEM
    # o  : (1, tb)  lane-dense output row

    # ---- layer 1: h1 = relu(state @ W1s + action @ W1a + b1) (no concat needed) ----
    h1 = jnp.dot(xs_ref[...], w1s_ref[...], preferred_element_type=jnp.float32)
    if unroll_action:
        # Da is tiny: unrolled VPU broadcast-FMA instead of a K<=16 MXU matmul
        # (that pass would be >90% K-padding; VALU slots are idle here).
        xa = xa_ref[...].astype(jnp.float32)
        w1a = w1a_ref[...]
        for d in range(xa_ref.shape[1]):
            h1 = h1 + xa[:, d:d + 1] * w1a[d:d + 1, :]
    else:
        h1 = h1 + jnp.dot(xa_ref[...], w1a_ref[...],
                          preferred_element_type=jnp.float32)
    h1 = jnp.maximum(h1 + b1_ref[...], 0.0)          # f32 bias + ReLU (VPU)

    # ---- layer 2 ----
    h2 = jnp.dot(h1.astype(w2_ref.dtype), w2_ref[...],
                 preferred_element_type=jnp.float32)
    h2 = jnp.maximum(h2 + b2_ref[...], 0.0)          # f32 bias + ReLU (VPU)

    # ---- layer 3 (H -> 1), produced LANE-DENSE: q_row = w3 @ h2^T  -> (1, tb) ----
    # Lane-dense output row avoids masked vst.msk partial stores / narrow writeback
    # DMAs that a (tb, 1) output block would force.
    q_row = jnp.dot(w3_ref[...], h2.T, preferred_element_type=jnp.float32)
    o_ref[...] = (q_row + b3_ref[0, 0]).astype(o_ref.dtype)


def critic_forward(state, action, params, *, block_b=1024,
                   matmul_dtype=jnp.float32, core_parallel=False):
    """state: (B, *dims), action: (B, Da) -> (B, 1) float32."""
    B = state.shape[0]
    state_flat = state.reshape(B, -1)
    w1s, w1a, b1, w2, b2, w3_row, b3 = params

    Ds = state_flat.shape[1]
    Da = action.shape[1]
    H = w2.shape[0]

    unroll_action = Da <= 16

    # Cast the *streamed* matmul operands at the call boundary so the dominant
    # (B, Ds) HBM stream is actually halved when matmul_dtype=bf16 (recommended on
    # v5e/v6e/v7x alike).  Elementwise work (bias, ReLU, final row) stays f32.
    if state_flat.dtype != matmul_dtype:
        state_flat = state_flat.astype(matmul_dtype)
    w1s = w1s.astype(matmul_dtype)
    w2 = w2.astype(matmul_dtype)
    if not unroll_action:
        action = action.astype(matmul_dtype)
        w1a = w1a.astype(matmul_dtype)
    # b1, b2, w3_row, b3 stay f32.

    # --- VMEM budgeting: resident weights (double-buffered constant blocks) +
    #     double-buffered activation blocks + f32 intermediates, against a working-set
    #     budget that fits v5e/v6e/v7x scoped VMEM once vmem_limit_bytes is raised. ---
    itm = lambda a: a.dtype.itemsize
    weight_bytes = sum(int(p.size) * p.dtype.itemsize
                       for p in (w1s, w1a, b1, w2, b2, w3_row))
    resident = 2 * weight_bytes
    act_row = (2 * (Ds * itm(state_flat) + Da * itm(action))   # in blocks, x2 buffers
               + 2 * 4                                         # (1, tb) f32 out row, x2
               + 4 * (2 * H + 8))                              # h1/h2/q f32 intermediates
    budget = 36 * 1024 * 1024
    # TODO(synk): if `resident` alone approaches the budget (huge Ds*H, esp. on v7x's
    # 64 MiB VMEM), add a Ds-reduction grid axis with an f32 h1 accumulator instead of
    # holding w1s fully resident.
    avail = max(budget - resident, 2 * 1024 * 1024)
    max_tb = max(16, avail // act_row)

    tb = min(block_b, max_tb)
    if tb >= B:
        tb = B                                    # full-dim blocks: always legal
    else:
        tb = max(256, (tb // 256) * 256)          # MXU-height multiple, lane-dense out
    grid_n = pl.cdiv(B, tb)
    b_pad = grid_n * tb                           # padded tail columns are discarded

    # Activations blocked over batch; weights/biases constant index_map -> VMEM-resident.
    x_spec = pl.BlockSpec((tb, Ds), lambda i: (i, 0))
    a_spec = pl.BlockSpec((tb, Da), lambda i: (i, 0))
    const = lambda arr: pl.BlockSpec(arr.shape, lambda i: (0,) * arr.ndim)
    b3_spec = pl.BlockSpec(memory_space=pltpu.MemorySpace.SMEM)   # scalar bias in SMEM
    out_spec = pl.BlockSpec((1, tb), lambda i: (0, i))            # lane-dense out row

    # v7x: CORE_PARALLEL actually splits the batch loop across the two TensorCores;
    # plain "parallel" is kept as the portable default (near-no-op on 1-TC chips).
    dims = (pltpu.CORE_PARALLEL,) if core_parallel else ("parallel",)

    operands = (state_flat, action, w1s, w1a, b1, w2, b2, w3_row, b3)
    bytes_accessed = sum(int(p.size) * p.dtype.itemsize for p in operands) + 4 * b_pad
    cost = pl.CostEstimate(
        flops=2 * B * (Ds * H + Da * H + H * H + H),
        transcendentals=0,
        bytes_accessed=int(bytes_accessed),
    )

    kernel = functools.partial(critic_kernel, unroll_action=unroll_action)
    out_row = pl.pallas_call(
        kernel,
        out_shape=jax.ShapeDtypeStruct((1, b_pad), jnp.float32),
        grid=(grid_n,),
        in_specs=[x_spec, a_spec, const(w1s), const(w1a), const(b1),
                  const(w2), const(b2), const(w3_row), b3_spec],
        out_specs=out_spec,
        compiler_params=pltpu.CompilerParams(
            dimension_semantics=dims,
            vmem_limit_bytes=44 * 1024 * 1024,   # above the v5e 16 MiB scoped default,
        ),                                       # below v7x's 64 MiB physical VMEM
        cost_estimate=cost,
    )(*operands)

    return out_row[0, :B].reshape(B, 1)


def init_critic_params(key, input_dim, hidden_size, action_dim):
    """PyTorch-style uniform init; W1 stored split (state part / action part),
    weights stored (in_features, out_features); w3 stored as a (1, H) row."""
    def uniform(k, shape, bound):
        return jax.random.uniform(k, shape, jnp.float32, -bound, bound)

    k1s, k1a, k1b, k2w, k2b, k3w, k3b = jax.random.split(key, 7)
    fan1 = input_dim + action_dim
    bnd1 = fan1 ** -0.5
    bnd2 = hidden_size ** -0.5

    w1s = uniform(k1s, (input_dim, hidden_size), bnd1)
    w1a = uniform(k1a, (action_dim, hidden_size), bnd1)
    b1 = uniform(k1b, (1, hidden_size), bnd1)
    w2 = uniform(k2w, (hidden_size, hidden_size), bnd2)
    b2 = uniform(k2b, (1, hidden_size), bnd2)
    w3_row = uniform(k3w, (1, hidden_size), bnd2)
    b3 = uniform(k3b, (1, 1), bnd2)
    return (w1s, w1a, b1, w2, b2, w3_row, b3)


if __name__ == "__main__":
    # Small shapes consistent with the module: state (B, input_dim), action (B, action_dim).
    B, input_dim, hidden_size, action_dim = 2, 16, 32, 4

    key = jax.random.PRNGKey(0)
    kp, ks, ka = jax.random.split(key, 3)

    params = init_critic_params(kp, input_dim, hidden_size, action_dim)
    state = jax.random.normal(ks, (B, input_dim), jnp.float32)
    action = jax.random.normal(ka, (B, action_dim), jnp.float32)

    q = critic_forward(state, action, params)
    q = jax.block_until_ready(q)

    # Pure-JAX reference of the original module's math.
    w1s, w1a, b1, w2, b2, w3_row, b3 = params
    x = jnp.concatenate([state.reshape(B, -1), action], axis=-1)
    w1 = jnp.concatenate([w1s, w1a], axis=0)
    ref = jnp.maximum(x @ w1 + b1, 0.0)
    ref = jnp.maximum(ref @ w2 + b2, 0.0)
    ref = ref @ w3_row.T + b3

    assert q.shape == (B, 1)
    assert jnp.allclose(q, ref, atol=1e-4), "f32 kernel mismatch vs reference"

    # bf16-matmul path: streamed state is passed as bf16 at the boundary (HBM saving);
    # looser tolerance for bf16 rounding.
    q_bf16 = jax.block_until_ready(
        critic_forward(state.astype(jnp.bfloat16), action, params,
                       matmul_dtype=jnp.bfloat16))
    assert q_bf16.shape == (B, 1)
    assert jnp.allclose(q_bf16, ref, atol=5e-2, rtol=5e-2), "bf16 kernel mismatch vs reference"

    print("KERNEL_OK")
</pallas_src>

<mosaic_0001>
module attributes {stable_mosaic.version = 11 : i64} {
  func.func @critic_kernel(%arg0: i32, %arg1: memref<2x16xf32, #tpu.memory_space<vmem>>, %arg2: memref<2x4xf32, #tpu.memory_space<vmem>>, %arg3: memref<16x32xf32, #tpu.memory_space<vmem>>, %arg4: memref<4x32xf32, #tpu.memory_space<vmem>>, %arg5: memref<1x32xf32, #tpu.memory_space<vmem>>, %arg6: memref<32x32xf32, #tpu.memory_space<vmem>>, %arg7: memref<1x32xf32, #tpu.memory_space<vmem>>, %arg8: memref<1x32xf32, #tpu.memory_space<vmem>>, %arg9: memref<1x1xf32, #tpu.memory_space<smem>>, %arg10: memref<1x2xf32, #tpu.memory_space<vmem>>) attributes {dimension_semantics = [#tpu.dimension_semantics<parallel>], iteration_bounds = array<i64: 1>, scalar_prefetch = 0 : i64, scratch_operands = 0 : i64, tpu.core_type = #tpu.core_type<tc>, window_params = [{transform_indices = @transform_0, window_bounds = array<i64: 2, 16>}, {transform_indices = @transform_1, window_bounds = array<i64: 2, 4>}, {pipeline_mode = #tpu.pipeline_mode<synchronous>, transform_indices = @transform_2, window_bounds = array<i64: 16, 32>}, {pipeline_mode = #tpu.pipeline_mode<synchronous>, transform_indices = @transform_3, window_bounds = array<i64: 4, 32>}, {pipeline_mode = #tpu.pipeline_mode<synchronous>, transform_indices = @transform_4, window_bounds = array<i64: 1, 32>}, {pipeline_mode = #tpu.pipeline_mode<synchronous>, transform_indices = @transform_5, window_bounds = array<i64: 32, 32>}, {pipeline_mode = #tpu.pipeline_mode<synchronous>, transform_indices = @transform_6, window_bounds = array<i64: 1, 32>}, {pipeline_mode = #tpu.pipeline_mode<synchronous>, transform_indices = @transform_7, window_bounds = array<i64: 1, 32>}, {transform_indices = @transform_8, window_bounds = array<i64: 1, 1>}, {transform_indices = @transform_9, window_bounds = array<i64: 1, 2>}]} {
    %c0 = arith.constant 0 : index
    %c0_0 = arith.constant 0 : index
    %0 = vector.load %arg1[%c0, %c0_0] : memref<2x16xf32, #tpu.memory_space<vmem>>, vector<2x16xf32>
    %c0_1 = arith.constant 0 : index
    %c0_2 = arith.constant 0 : index
    %1 = vector.load %arg3[%c0_1, %c0_2] : memref<16x32xf32, #tpu.memory_space<vmem>>, vector<16x32xf32>
    %cst = arith.constant dense<0.000000e+00> : vector<2x32xf32>
    %2 = tpu.matmul %0, %1, %cst {dimension_numbers = #tpu.dot_dimension_numbers<[1], [0], [0], [1], [0, 0, 1, 1], [], []>} : vector<2x16xf32>, vector<16x32xf32>, vector<2x32xf32> -> vector<2x32xf32>
    %c0_3 = arith.constant 0 : index
    %c0_4 = arith.constant 0 : index
    %3 = vector.load %arg2[%c0_3, %c0_4] : memref<2x4xf32, #tpu.memory_space<vmem>>, vector<2x4xf32>
    %c0_5 = arith.constant 0 : index
    %c0_6 = arith.constant 0 : index
    %4 = vector.load %arg4[%c0_5, %c0_6] : memref<4x32xf32, #tpu.memory_space<vmem>>, vector<4x32xf32>
    %5 = vector.extract_strided_slice %3 {offsets = [0, 0], sizes = [2, 1], strides = [1, 1]} : vector<2x4xf32> to vector<2x1xf32>
    %6 = vector.extract_strided_slice %4 {offsets = [0, 0], sizes = [1, 32], strides = [1, 1]} : vector<4x32xf32> to vector<1x32xf32>
    %7 = vector.broadcast %5 : vector<2x1xf32> to vector<2x32xf32>
    %8 = vector.broadcast %6 : vector<1x32xf32> to vector<2x32xf32>
    %9 = arith.mulf %7, %8 : vector<2x32xf32>
    %10 = arith.addf %2, %9 : vector<2x32xf32>
    %11 = vector.extract_strided_slice %3 {offsets = [0, 1], sizes = [2, 1], strides = [1, 1]} : vector<2x4xf32> to vector<2x1xf32>
    %12 = vector.extract_strided_slice %4 {offsets = [1, 0], sizes = [1, 32], strides = [1, 1]} : vector<4x32xf32> to vector<1x32xf32>
    %13 = vector.broadcast %11 : vector<2x1xf32> to vector<2x32xf32>
    %14 = vector.broadcast %12 : vector<1x32xf32> to vector<2x32xf32>
    %15 = arith.mulf %13, %14 : vector<2x32xf32>
    %16 = arith.addf %10, %15 : vector<2x32xf32>
    %17 = vector.extract_strided_slice %3 {offsets = [0, 2], sizes = [2, 1], strides = [1, 1]} : vector<2x4xf32> to vector<2x1xf32>
    %18 = vector.extract_strided_slice %4 {offsets = [2, 0], sizes = [1, 32], strides = [1, 1]} : vector<4x32xf32> to vector<1x32xf32>
    %19 = vector.broadcast %17 : vector<2x1xf32> to vector<2x32xf32>
    %20 = vector.broadcast %18 : vector<1x32xf32> to vector<2x32xf32>
    %21 = arith.mulf %19, %20 : vector<2x32xf32>
    %22 = arith.addf %16, %21 : vector<2x32xf32>
    %23 = vector.extract_strided_slice %3 {offsets = [0, 3], sizes = [2, 1], strides = [1, 1]} : vector<2x4xf32> to vector<2x1xf32>
    %24 = vector.extract_strided_slice %4 {offsets = [3, 0], sizes = [1, 32], strides = [1, 1]} : vector<4x32xf32> to vector<1x32xf32>
    %25 = vector.broadcast %23 : vector<2x1xf32> to vector<2x32xf32>
    %26 = vector.broadcast %24 : vector<1x32xf32> to vector<2x32xf32>
    %27 = arith.mulf %25, %26 : vector<2x32xf32>
    %28 = arith.addf %22, %27 : vector<2x32xf32>
    %c0_7 = arith.constant 0 : index
    %c0_8 = arith.constant 0 : index
    %29 = vector.load %arg5[%c0_7, %c0_8] : memref<1x32xf32, #tpu.memory_space<vmem>>, vector<1x32xf32>
    %30 = vector.broadcast %29 : vector<1x32xf32> to vector<2x32xf32>
    %31 = arith.addf %28, %30 : vector<2x32xf32>
    %cst_9 = arith.constant 0.000000e+00 : f32
    %32 = vector.broadcast %cst_9 : f32 to vector<2x32xf32>
    %33 = arith.maximumf %31, %32 : vector<2x32xf32>
    %c0_10 = arith.constant 0 : index
    %c0_11 = arith.constant 0 : index
    %34 = vector.load %arg6[%c0_10, %c0_11] : memref<32x32xf32, #tpu.memory_space<vmem>>, vector<32x32xf32>
    %cst_12 = arith.constant dense<0.000000e+00> : vector<2x32xf32>
    %35 = tpu.matmul %33, %34, %cst_12 {dimension_numbers = #tpu.dot_dimension_numbers<[1], [0], [0], [1], [0, 0, 1, 1], [], []>} : vector<2x32xf32>, vector<32x32xf32>, vector<2x32xf32> -> vector<2x32xf32>
    %c0_13 = arith.constant 0 : index
    %c0_14 = arith.constant 0 : index
    %36 = vector.load %arg7[%c0_13, %c0_14] : memref<1x32xf32, #tpu.memory_space<vmem>>, vector<1x32xf32>
    %37 = vector.broadcast %36 : vector<1x32xf32> to vector<2x32xf32>
    %38 = arith.addf %35, %37 : vector<2x32xf32>
    %cst_15 = arith.constant 0.000000e+00 : f32
    %39 = vector.broadcast %cst_15 : f32 to vector<2x32xf32>
    %40 = arith.maximumf %38, %39 : vector<2x32xf32>
    %c0_16 = arith.constant 0 : index
    %c0_17 = arith.constant 0 : index
    %41 = vector.load %arg8[%c0_16, %c0_17] : memref<1x32xf32, #tpu.memory_space<vmem>>, vector<1x32xf32>
    %42 = tpu.transpose %40, [1, 0] : vector<2x32xf32> -> vector<32x2xf32>
    %cst_18 = arith.constant dense<0.000000e+00> : vector<1x2xf32>
    %43 = tpu.matmul %41, %42, %cst_18 {dimension_numbers = #tpu.dot_dimension_numbers<[1], [0], [0], [1], [0, 0, 1, 1], [], []>} : vector<1x32xf32>, vector<32x2xf32>, vector<1x2xf32> -> vector<1x2xf32>
    %c0_19 = arith.constant 0 : index
    %c0_20 = arith.constant 0 : index
    %44 = memref.load %arg9[%c0_19, %c0_20] : memref<1x1xf32, #tpu.memory_space<smem>>
    %45 = vector.broadcast %44 : f32 to vector<1x2xf32>
    %46 = arith.addf %43, %45 : vector<1x2xf32>
    %c0_21 = arith.constant 0 : index
    %c0_22 = arith.constant 0 : index
    %47 = vector.load %arg10[%c0_21, %c0_22] : memref<1x2xf32, #tpu.memory_space<vmem>>, vector<1x2xf32>
    tpu.vector_store %arg10[%c0_21, %c0_22], %46 {strides = array<i32>} : memref<1x2xf32, #tpu.memory_space<vmem>>, vector<1x2xf32>,
    return
  }
  func.func @transform_0(%arg0: i32) -> (i32, i32) {
    %c0_i32 = arith.constant 0 : i32
    %c0_i32_0 = arith.constant 0 : i32
    return %arg0, %c0_i32 : i32, i32
  }
  func.func @transform_1(%arg0: i32) -> (i32, i32) {
    %c0_i32 = arith.constant 0 : i32
    %c0_i32_0 = arith.constant 0 : i32
    return %arg0, %c0_i32 : i32, i32
  }
  func.func @transform_2(%arg0: i32) -> (i32, i32) {
    %c0_i32 = arith.constant 0 : i32
    %c0_i32_0 = arith.constant 0 : i32
    %c0_i32_1 = arith.constant 0 : i32
    return %c0_i32, %c0_i32_0 : i32, i32
  }
  func.func @transform_3(%arg0: i32) -> (i32, i32) {
    %c0_i32 = arith.constant 0 : i32
    %c0_i32_0 = arith.constant 0 : i32
    %c0_i32_1 = arith.constant 0 : i32
    return %c0_i32, %c0_i32_0 : i32, i32
  }
  func.func @transform_4(%arg0: i32) -> (i32, i32) {
    %c0_i32 = arith.constant 0 : i32
    %c0_i32_0 = arith.constant 0 : i32
    %c0_i32_1 = arith.constant 0 : i32
    return %c0_i32, %c0_i32_0 : i32, i32
  }
  func.func @transform_5(%arg0: i32) -> (i32, i32) {
    %c0_i32 = arith.constant 0 : i32
    %c0_i32_0 = arith.constant 0 : i32
    %c0_i32_1 = arith.constant 0 : i32
    return %c0_i32, %c0_i32_0 : i32, i32
  }
  func.func @transform_6(%arg0: i32) -> (i32, i32) {
    %c0_i32 = arith.constant 0 : i32
    %c0_i32_0 = arith.constant 0 : i32
    %c0_i32_1 = arith.constant 0 : i32
    return %c0_i32, %c0_i32_0 : i32, i32
  }
  func.func @transform_7(%arg0: i32) -> (i32, i32) {
    %c0_i32 = arith.constant 0 : i32
    %c0_i32_0 = arith.constant 0 : i32
    %c0_i32_1 = arith.constant 0 : i32
    return %c0_i32, %c0_i32_0 : i32, i32
  }
  func.func @transform_8(%arg0: i32) -> (i32, i32) {
    %c0_i32 = arith.constant 0 : i32
    %c0_i32_0 = arith.constant 0 : i32
    %c0_i32_1 = arith.constant 0 : i32
    return %c0_i32, %c0_i32_0 : i32, i32
  }
  func.func @transform_9(%arg0: i32) -> (i32, i32) {
    %c0_i32 = arith.constant 0 : i32
    %c0_i32_0 = arith.constant 0 : i32
    return %c0_i32, %arg0 : i32, i32
  }
}

</mosaic_0001>

<llo_original>
// kernel: tpu_custom_call.1
$region0: #{tpu_custom_call.1}
  #allocation0 [shape = 'u32[]', space=smem, size = 0x4, offset = 0x4, fixed_abs, tag = 'smem constant byte address 0x4 - core index']
  #allocation1 [shape = 'u32[144,128]{1,0:T(1,128)}', space=vmem, size = 0x12000, scoped, tag = 'internal scratch']
  #allocation2 [shape = 'f32[1,1]{1,0:T(1,128)S(6)}', space=smem, size = 0x200, scoped, tag = 'scoped memory for tpu_custom_call.1']
  %s0 = inlined_call_operand.vmem [shape: f32[2,16], index: 0, kind: input, shape index: {}]
  %s1 = inlined_call_operand.hbm [shape: f32[2,4], index: 1, kind: input, shape index: {}]
  %s2 = inlined_call_operand.hbm [shape: f32[16,32], index: 2, kind: input, shape index: {}]
  %s3 = inlined_call_operand.vmem [shape: f32[4,32], index: 3, kind: input, shape index: {}]
  %s4 = inlined_call_operand.vmem [shape: f32[1,32], index: 4, kind: input, shape index: {}]
  %s5 = inlined_call_operand.hbm [shape: f32[32,32], index: 5, kind: input, shape index: {}]
  %s6 = inlined_call_operand.vmem [shape: f32[1,32], index: 6, kind: input, shape index: {}]
  %s7 = inlined_call_operand.vmem [shape: f32[1,32], index: 7, kind: input, shape index: {}]
  %s8 = inlined_call_operand.<no memory space> [shape: f32[1,1], index: 8, kind: input, shape index: {}]
  %s9 = inlined_call_operand.hbm [shape: f32[1,2], index: 9, kind: output, shape index: {}]
  %s10 = sld [smem:[#allocation0]]
  $region58: #{tpu_custom_call.1} parent=0
    _
  %s12 = ssub.s32 1, %s10
  %s13 = scalar_select 0, %s12, %s10
  %14 = sst [smem:[#allocation2]] %s8
  $region1: #{tpu_custom_call.1} parent=0
    #allocation3 [shape = 'u8[1024]{0}', space=vmem, size = 0x400, scoped, tag = 'input window, operand 1, single buffered']
    #allocation4 [shape = 's32[1]{0}', space=sflag, size = 0x4, scoped, tag = 'scoped memory for tpu_custom_call.1']
    #allocation5 [shape = 's32[1]{0}', space=sflag, size = 0x4, scoped, tag = 'scoped memory for tpu_custom_call.1']
    #allocation6 [shape = 'u8[8192]{0}', space=vmem, size = 0x2000, scoped, tag = 'input window, operand 2, single buffered']
    #allocation7 [shape = 's32[1]{0}', space=sflag, size = 0x4, scoped, tag = 'scoped memory for tpu_custom_call.1']
    #allocation8 [shape = 'u8[16384]{0}', space=vmem, size = 0x4000, scoped, tag = 'input window, operand 5, single buffered']
    #allocation9 [shape = 'u8[512]{0}', space=vmem, size = 0x400, scoped, tag = 'output window, operand 0, single buffered']
    %15 = vsyncpa [#allocation4], 0
    %16 = vsyncpa [#allocation7], 0
    %17 = vsyncpa [#allocation5], 0
    // Predicated region
    $region2: #{tpu_custom_call.1} parent=1 // pred_check
      _
    $region3: #{tpu_custom_call.1} parent=1 // pred_check_branch
      %19 = sbr.rel (0) target = $region5
    $region4: #{tpu_custom_call.1} parent=1 // pred_region
      _
    $region5: #{tpu_custom_call.1} parent=1 // pred_fallthru
      _
    // Predicated region
    $region6: #{tpu_custom_call.1} parent=1 // pred_check
      _
    $region7: #{tpu_custom_call.1} parent=1 // pred_check_branch
      %21 = sbr.rel (0) target = $region9
    $region8: #{tpu_custom_call.1} parent=1 // pred_region
      %s23 = ssub.s32 32, 32
      %24 = vsyncadd [#allocation4], %s23
      %s26 = sshll.u32 [#allocation3], 4
      %s27 = int_to_ptr.vmem [resolvable:$true] %s26
      %29 = dma.hbm_to_vmem [thread:$0]  %s1, 32, %s27, [#allocation4]
    $region9: #{tpu_custom_call.1} parent=1 // pred_fallthru
      _
    // Predicated region
    $region10: #{tpu_custom_call.1} parent=1 // pred_check
      _
    $region11: #{tpu_custom_call.1} parent=1 // pred_check_branch
      %31 = sbr.rel (0) target = $region13
    $region12: #{tpu_custom_call.1} parent=1 // pred_region
      %s33 = ssub.s32 256, 256
      %34 = vsyncadd [#allocation7], %s33
      %s35 = sshll.u32 [#allocation6], 4
      %s36 = int_to_ptr.vmem [resolvable:$true] %s35
      %41 = dma.hbm_to_vmem [thread:$0]  %s2, 256, %s36, [#allocation7], 128, 128, 8
    $region13: #{tpu_custom_call.1} parent=1 // pred_fallthru
      _
    // Predicated region
    $region14: #{tpu_custom_call.1} parent=1 // pred_check
      _
    $region15: #{tpu_custom_call.1} parent=1 // pred_check_branch
      %43 = sbr.rel (0) target = $region17
    $region16: #{tpu_custom_call.1} parent=1 // pred_region
      _
    $region17: #{tpu_custom_call.1} parent=1 // pred_fallthru
      _
    // Predicated region
    $region18: #{tpu_custom_call.1} parent=1 // pred_check
      _
    $region19: #{tpu_custom_call.1} parent=1 // pred_check_branch
      %45 = sbr.rel (0) target = $region21
    $region20: #{tpu_custom_call.1} parent=1 // pred_region
      _
    $region21: #{tpu_custom_call.1} parent=1 // pred_fallthru
      _
    // Predicated region
    $region22: #{tpu_custom_call.1} parent=1 // pred_check
      _
    $region23: #{tpu_custom_call.1} parent=1 // pred_check_branch
      %47 = sbr.rel (0) target = $region25
    $region24: #{tpu_custom_call.1} parent=1 // pred_region
      %s49 = ssub.s32 512, 512
      %50 = vsyncadd [#allocation7], %s49
      %s51 = sshll.u32 [#allocation8], 4
      %s52 = int_to_ptr.vmem [resolvable:$true] %s51
      %57 = dma.hbm_to_vmem [thread:$0]  %s5, 512, %s52, [#allocation7], 128, 128, 8
    $region25: #{tpu_custom_call.1} parent=1 // pred_fallthru
      _
    // Predicated region
    $region26: #{tpu_custom_call.1} parent=1 // pred_check
      _
    $region27: #{tpu_custom_call.1} parent=1 // pred_check_branch
      %59 = sbr.rel (0) target = $region29
    $region28: #{tpu_custom_call.1} parent=1 // pred_region
      _
    $region29: #{tpu_custom_call.1} parent=1 // pred_fallthru
      _
    // Predicated region
    $region30: #{tpu_custom_call.1} parent=1 // pred_check
      _
    $region31: #{tpu_custom_call.1} parent=1 // pred_check_branch
      %61 = sbr.rel (0) target = $region33
    $region32: #{tpu_custom_call.1} parent=1 // pred_region
      _
    $region33: #{tpu_custom_call.1} parent=1 // pred_fallthru
      _
    // Predicated region
    $region34: #{tpu_custom_call.1} parent=1 // pred_check
      _
    $region35: #{tpu_custom_call.1} parent=1 // pred_check_branch
      %63 = sbr.rel (0) target = $region37
    $region36: #{tpu_custom_call.1} parent=1 // pred_region
      _
    $region37: #{tpu_custom_call.1} parent=1 // pred_fallthru
      _
    // Predicated region
    $region38: #{tpu_custom_call.1} parent=1 // pred_check
      _
    $region39: #{tpu_custom_call.1} parent=1 // pred_check_branch
      %65 = sbr.rel (0) target = $region41
    $region40: #{tpu_custom_call.1} parent=1 // pred_region
      %66 = dma.done [#allocation4], 32
    $region41: #{tpu_custom_call.1} parent=1 // pred_fallthru
      _
    // Predicated region
    $region42: #{tpu_custom_call.1} parent=1 // pred_check
      _
    $region43: #{tpu_custom_call.1} parent=1 // pred_check_branch
      %68 = sbr.rel (0) target = $region45
    $region44: #{tpu_custom_call.1} parent=1 // pred_region
      %69 = dma.done [#allocation7], 256
    $region45: #{tpu_custom_call.1} parent=1 // pred_fallthru
      _
    // Predicated region
    $region46: #{tpu_custom_call.1} parent=1 // pred_check
      _
    $region47: #{tpu_custom_call.1} parent=1 // pred_check_branch
      %71 = sbr.rel (0) target = $region49
    $region48: #{tpu_custom_call.1} parent=1 // pred_region
      %72 = dma.done [#allocation7], 512
    $region49: #{tpu_custom_call.1} parent=1 // pred_fallthru
      _
    %v73 = vld [vmem:[%s0] sm:$0x3]
    %v74 = vld [vmem:[#allocation6] sm:$0xff]
    %v75 = vld [vmem:[#allocation6 + $0x8] sm:$0xff]
    %v76 = vld [vmem:[#allocation3] sm:$0x3]
    %v77 = vld [vmem:[%s3] sm:$0xf]
    %79 = vset.pattern.permute.xlu0 0
    %80 = vperm.xlu0 %79, %v76
    %v81 = vpop.permute.xlu0 %80
    %v83 = vlaneseq
    %v84 = vshrl.u32 %v83, 7
    %v85 = vsub.s32 0, %v84
    %v86 = vrot.slane %v77, %v85
    %v87 = vmul.f32 %v81, %v86
    %vm88 = vcmask 130048
    %v90 = vsel %vm88, %v73, 0
    %92 = vmatprep.subr.mxu0 0.0
    %93 = vmatpush1.msra.mxu0 %v74
    %94 = vmatprep.subr.mxu0 0.0
    %95 = vmatpush1.msra.mxu0 %v75
    %96 = vmatprep.subr.mxu0 0.0
    %97 = vmatpush1.msra.mxu0 0.0
    %98 = vmatprep.subr.mxu0 0.0
    %99 = vmatpush1.msra.mxu0 0.0
    %100 = vmatprep.subr.mxu0 0.0
    %101 = vmatpush1.msra.mxu0 0.0
    %102 = vmatprep.subr.mxu0 0.0
    %103 = vmatpush1.msra.mxu0 0.0
    %104 = vmatprep.subr.mxu0 0.0
    %105 = vmatpush1.msra.mxu0 0.0
    %106 = vmatprep.subr.mxu0 0.0
    %107 = vmatpush1.msra.mxu0 0.0
    %108 = vmatprep.subr.mxu0 0.0
    %109 = vmatpush1.msra.mxu0 0.0
    %110 = vmatprep.subr.mxu0 0.0
    %111 = vmatpush1.msra.mxu0 0.0
    %112 = vmatprep.subr.mxu0 0.0
    %113 = vmatpush1.msra.mxu0 0.0
    %114 = vmatprep.subr.mxu0 0.0
    %115 = vmatpush1.msra.mxu0 0.0
    %116 = vmatprep.subr.mxu0 0.0
    %117 = vmatpush1.msra.mxu0 0.0
    %118 = vmatprep.subr.mxu0 0.0
    %119 = vmatpush1.msra.mxu0 0.0
    %120 = vmatprep.subr.mxu0 0.0
    %121 = vmatpush1.msra.mxu0 0.0
    %122 = vmatprep.subr.mxu0 0.0
    %123 = vmatpush1.msra.mxu0 0.0
    %124 = vmatprep.subr.mxu0 0.0
    %125 = vmatpush1.msra.mxu0 0.0
    %126 = vmatprep.subr.mxu0 0.0
    %127 = vmatpush1.msra.mxu0 0.0
    %128 = vmatprep.subr.mxu0 0.0
    %129 = vmatpush1.msra.mxu0 0.0
    %130 = vmatprep.subr.mxu0 0.0
    %131 = vmatpush1.msra.mxu0 0.0
    %132 = vmatprep.subr.mxu0 0.0
    %133 = vmatpush1.msra.mxu0 0.0
    %134 = vmatprep.subr.mxu0 0.0
    %135 = vmatpush1.msra.mxu0 0.0
    %136 = vmatprep.subr.mxu0 0.0
    %137 = vmatpush1.msra.mxu0 0.0
    %138 = vmatprep.subr.mxu0 0.0
    %139 = vmatpush1.msra.mxu0 0.0
    %140 = vmatprep.subr.mxu0 0.0
    %141 = vmatpush1.msra.mxu0 0.0
    %142 = vmatprep.subr.mxu0 0.0
    %143 = vmatpush1.msra.mxu0 0.0
    %144 = vmatprep.subr.mxu0 0.0
    %145 = vmatpush1.msra.mxu0 0.0
    %146 = vmatprep.subr.mxu0 0.0
    %147 = vmatpush1.msra.mxu0 0.0
    %148 = vmatprep.subr.mxu0 0.0
    %149 = vmatpush1.msra.mxu0 0.0
    %150 = vmatprep.subr.mxu0 0.0
    %151 = vmatpush1.msra.mxu0 0.0
    %152 = vmatprep.subr.mxu0 0.0
    %153 = vmatpush1.msra.mxu0 0.0
    %154 = vmatprep.subr.mxu0 0.0
    %155 = vmatpush1.msra.mxu0 0.0
    %156 = vmatprep.mubr.f32.mxu0 0.0
    %157 = vmatmul.mubr.f32.gmra.mrb[0].mxu0 %v90
    %v158 = vpop.f32.mrb[0].mxu0
    %v159 = vadd.f32 %v87, %v158
    %v160 = vpop.f32.mrb[0].mxu0
    %161 = vdwg.mxu0
    %162 = vset.pattern.permute.xlu0 1
    %163 = vperm.xlu0 %162, %v76
    %v164 = vpop.permute.xlu0 %163
    %v166 = vlaneseq
    %v167 = vshrl.u32 %v166, 7
    %v168 = vsub.s32 1, %v167
    %v169 = vrot.slane %v77, %v168
    %v170 = vmul.f32 %v164, %v169
    %v171 = vadd.f32 %v159, %v170
    %172 = vset.pattern.permute.xlu0 2
    %173 = vperm.xlu0 %172, %v76
    %v174 = vpop.permute.xlu0 %173
    %v176 = vlaneseq
    %v177 = vshrl.u32 %v176, 7
    %v178 = vsub.s32 2, %v177
    %v179 = vrot.slane %v77, %v178
    %v180 = vmul.f32 %v174, %v179
    %v181 = vadd.f32 %v171, %v180
    %182 = vset.pattern.permute.xlu0 3
    %183 = vperm.xlu0 %182, %v76
    %v184 = vpop.permute.xlu0 %183
    %v186 = vlaneseq
    %v187 = vshrl.u32 %v186, 7
    %v188 = vsub.s32 3, %v187
    %v189 = vrot.slane %v77, %v188
    %v190 = vmul.f32 %v184, %v189
    %v191 = vadd.f32 %v181, %v190
    %v192 = vld [vmem:[%s4] sm:$0x1]
    %v194 = vlaneseq
    %v195 = vshrl.u32 %v194, 7
    %v196 = vsub.s32 0, %v195
    %v197 = vrot.slane %v192, %v196
    %v199 = vadd.f32 %v191, %v197
    %v200 = vmax.f32 %v199, 0.0
    %v201 = vld [vmem:[#allocation8] sm:$0xff]
    %v202 = vld [vmem:[#allocation8 + $0x8] sm:$0xff]
    %v203 = vld [vmem:[#allocation8 + $0x10] sm:$0xff]
    %v204 = vld [vmem:[#allocation8 + $0x18] sm:$0xff]
    %v205 = vld [vmem:[%s6] sm:$0x1]
    %v207 = vlaneseq
    %v208 = vshrl.u32 %v207, 7
    %v209 = vsub.s32 0, %v208
    %v210 = vrot.slane %v205, %v209
    %vm212 = vcmask 261120
    %v214 = vsel %vm212, %v200, 0
    %216 = vmatprep.subr.mxu0 0.0
    %217 = vmatpush1.msra.mxu0 %v201
    %218 = vmatprep.subr.mxu0 0.0
    %219 = vmatpush1.msra.mxu0 %v202
    %220 = vmatprep.subr.mxu0 0.0
    %221 = vmatpush1.msra.mxu0 %v203
    %222 = vmatprep.subr.mxu0 0.0
    %223 = vmatpush1.msra.mxu0 %v204
    %224 = vmatprep.subr.mxu0 0.0
    %225 = vmatpush1.msra.mxu0 0.0
    %226 = vmatprep.subr.mxu0 0.0
    %227 = vmatpush1.msra.mxu0 0.0
    %228 = vmatprep.subr.mxu0 0.0
    %229 = vmatpush1.msra.mxu0 0.0
    %230 = vmatprep.subr.mxu0 0.0
    %231 = vmatpush1.msra.mxu0 0.0
    %232 = vmatprep.subr.mxu0 0.0
    %233 = vmatpush1.msra.mxu0 0.0
    %234 = vmatprep.subr.mxu0 0.0
    %235 = vmatpush1.msra.mxu0 0.0
    %236 = vmatprep.subr.mxu0 0.0
    %237 = vmatpush1.msra.mxu0 0.0
    %238 = vmatprep.subr.mxu0 0.0
    %239 = vmatpush1.msra.mxu0 0.0
    %240 = vmatprep.subr.mxu0 0.0
    %241 = vmatpush1.msra.mxu0 0.0
    %242 = vmatprep.subr.mxu0 0.0
    %243 = vmatpush1.msra.mxu0 0.0
    %244 = vmatprep.subr.mxu0 0.0
    %245 = vmatpush1.msra.mxu0 0.0
    %246 = vmatprep.subr.mxu0 0.0
    %247 = vmatpush1.msra.mxu0 0.0
    %248 = vmatprep.subr.mxu0 0.0
    %249 = vmatpush1.msra.mxu0 0.0
    %250 = vmatprep.subr.mxu0 0.0
    %251 = vmatpush1.msra.mxu0 0.0
    %252 = vmatprep.subr.mxu0 0.0
    %253 = vmatpush1.msra.mxu0 0.0
    %254 = vmatprep.subr.mxu0 0.0
    %255 = vmatpush1.msra.mxu0 0.0
    %256 = vmatprep.subr.mxu0 0.0
    %257 = vmatpush1.msra.mxu0 0.0
    %258 = vmatprep.subr.mxu0 0.0
    %259 = vmatpush1.msra.mxu0 0.0
    %260 = vmatprep.subr.mxu0 0.0
    %261 = vmatpush1.msra.mxu0 0.0
    %262 = vmatprep.subr.mxu0 0.0
    %263 = vmatpush1.msra.mxu0 0.0
    %264 = vmatprep.subr.mxu0 0.0
    %265 = vmatpush1.msra.mxu0 0.0
    %266 = vmatprep.subr.mxu0 0.0
    %267 = vmatpush1.msra.mxu0 0.0
    %268 = vmatprep.subr.mxu0 0.0
    %269 = vmatpush1.msra.mxu0 0.0
    %270 = vmatprep.subr.mxu0 0.0
    %271 = vmatpush1.msra.mxu0 0.0
    %272 = vmatprep.subr.mxu0 0.0
    %273 = vmatpush1.msra.mxu0 0.0
    %274 = vmatprep.subr.mxu0 0.0
    %275 = vmatpush1.msra.mxu0 0.0
    %276 = vmatprep.subr.mxu0 0.0
    %277 = vmatpush1.msra.mxu0 0.0
    %278 = vmatprep.subr.mxu0 0.0
    %279 = vmatpush1.msra.mxu0 0.0
    %280 = vmatprep.mubr.f32.mxu0 0.0
    %281 = vmatmul.mubr.f32.gmra.mrb[0].mxu0 %v214
    %v282 = vpop.f32.mrb[0].mxu0
    %v283 = vadd.f32 %v210, %v282
    %v284 = vpop.f32.mrb[0].mxu0
    %285 = vdwg.mxu0
    %v286 = vmax.f32 %v283, 0.0
    %v287 = vld [vmem:[%s7] sm:$0x1]
    %s288 = sld [smem:[#allocation2]]
    %v289 = vstv %s288
    %v291 = vsel %vm212, %v287, 0
    %v294 = vsel %vm212, %v286, 0
    %296 = vmatprep.subr.mxu0 0.0
    %297 = vmatpush1.xpose.msra.mxu0 %v294
    %298 = vmatprep.subr.mxu0 0.0
    %299 = vmatpush1.xpose.msra.mxu0 0.0
    %300 = vmatprep.subr.mxu0 0.0
    %301 = vmatpush1.xpose.msra.mxu0 0.0
    %302 = vmatprep.subr.mxu0 0.0
    %303 = vmatpush1.xpose.msra.mxu0 0.0
    %304 = vmatprep.subr.mxu0 0.0
    %305 = vmatpush1.xpose.msra.mxu0 0.0
    %306 = vmatprep.subr.mxu0 0.0
    %307 = vmatpush1.xpose.msra.mxu0 0.0
    %308 = vmatprep.subr.mxu0 0.0
    %309 = vmatpush1.xpose.msra.mxu0 0.0
    %310 = vmatprep.subr.mxu0 0.0
    %311 = vmatpush1.xpose.msra.mxu0 0.0
    %312 = vmatprep.subr.mxu0 0.0
    %313 = vmatpush1.xpose.msra.mxu0 0.0
    %314 = vmatprep.subr.mxu0 0.0
    %315 = vmatpush1.xpose.msra.mxu0 0.0
    %316 = vmatprep.subr.mxu0 0.0
    %317 = vmatpush1.xpose.msra.mxu0 0.0
    %318 = vmatprep.subr.mxu0 0.0
    %319 = vmatpush1.xpose.msra.mxu0 0.0
    %320 = vmatprep.subr.mxu0 0.0
    %321 = vmatpush1.xpose.msra.mxu0 0.0
    %322 = vmatprep.subr.mxu0 0.0
    %323 = vmatpush1.xpose.msra.mxu0 0.0
    %324 = vmatprep.subr.mxu0 0.0
    %325 = vmatpush1.xpose.msra.mxu0 0.0
    %326 = vmatprep.subr.mxu0 0.0
    %327 = vmatpush1.xpose.msra.mxu0 0.0
    %328 = vmatprep.subr.mxu0 0.0
    %329 = vmatpush1.xpose.msra.mxu0 0.0
    %330 = vmatprep.subr.mxu0 0.0
    %331 = vmatpush1.xpose.msra.mxu0 0.0
    %332 = vmatprep.subr.mxu0 0.0
    %333 = vmatpush1.xpose.msra.mxu0 0.0
    %334 = vmatprep.subr.mxu0 0.0
    %335 = vmatpush1.xpose.msra.mxu0 0.0
    %336 = vmatprep.subr.mxu0 0.0
    %337 = vmatpush1.xpose.msra.mxu0 0.0
    %338 = vmatprep.subr.mxu0 0.0
    %339 = vmatpush1.xpose.msra.mxu0 0.0
    %340 = vmatprep.subr.mxu0 0.0
    %341 = vmatpush1.xpose.msra.mxu0 0.0
    %342 = vmatprep.subr.mxu0 0.0
    %343 = vmatpush1.xpose.msra.mxu0 0.0
    %344 = vmatprep.subr.mxu0 0.0
    %345 = vmatpush1.xpose.msra.mxu0 0.0
    %346 = vmatprep.subr.mxu0 0.0
    %347 = vmatpush1.xpose.msra.mxu0 0.0
    %348 = vmatprep.subr.mxu0 0.0
    %349 = vmatpush1.xpose.msra.mxu0 0.0
    %350 = vmatprep.subr.mxu0 0.0
    %351 = vmatpush1.xpose.msra.mxu0 0.0
    %352 = vmatprep.subr.mxu0 0.0
    %353 = vmatpush1.xpose.msra.mxu0 0.0
    %354 = vmatprep.subr.mxu0 0.0
    %355 = vmatpush1.xpose.msra.mxu0 0.0
    %356 = vmatprep.subr.mxu0 0.0
    %357 = vmatpush1.xpose.msra.mxu0 0.0
    %358 = vmatprep.subr.mxu0 0.0
    %359 = vmatpush1.xpose.msra.mxu0 0.0
    %360 = vmatprep.mubr.f32.mxu0 0.0
    %361 = vmatmul.mubr.f32.gmra.mrb[0].mxu0 %v291
    %v362 = vpop.f32.mrb[0].mxu0
    %v363 = vadd.f32 %v289, %v362
    %v364 = vpop.f32.mrb[0].mxu0
    %365 = vdwg.mxu0
    %vm366 = vcmask 8192
    %367 = vst.msk [vmem:[#allocation9] sm:$0x1] %vm366, %v363
    // Predicated region
    $region50: #{tpu_custom_call.1} parent=1 // pred_check
      _
    $region51: #{tpu_custom_call.1} parent=1 // pred_check_branch
      %369 = sbr.rel (0) target = $region53
    $region52: #{tpu_custom_call.1} parent=1 // pred_region
      %s371 = ssub.s32 16, 16
      %372 = vsyncadd [#allocation5], %s371
      %s374 = sshll.u32 [#allocation9], 4
      %s375 = int_to_ptr.vmem [resolvable:$true] %s374
      %377 = dma.vmem_to_hbm [thread:$0]  %s375, 16, %s9, [#allocation5]
    $region53: #{tpu_custom_call.1} parent=1 // pred_fallthru
      _
    // Predicated region
    $region54: #{tpu_custom_call.1} parent=1 // pred_check
      _
    $region55: #{tpu_custom_call.1} parent=1 // pred_check_branch
      %379 = sbr.rel (0) target = $region57
    $region56: #{tpu_custom_call.1} parent=1 // pred_region
      %380 = dma.done [#allocation5], 16
    $region57: #{tpu_custom_call.1} parent=1 // pred_fallthru
      _
    %381 = vsyncpa [#allocation4], 1
    %382 = vsyncpa [#allocation7], 1
    %383 = vsyncpa [#allocation5], 1

</llo_original>
